<compile_context>
chip_gen: v5e
topology: v5e:2x2
jax: 0.10.0
libtpu: 0.0.40
codegen_flags: <defaults>
</compile_context>

<pallas_src>
import jax
import jax.numpy as jnp
from jax.experimental import pallas as pl
from jax.experimental.pallas import tpu as pltpu

EPS = 1e-5
NEG_SLOPE = 0.2
LANES = 128

# Row offsets inside the packed parameter slab (all multiples of 8 sublanes).
_W1_ROW = 0        # rows   0:16   -> w1 (C,128);  rows C:16 zero
_W2_ROW = 16       # rows  16:144  -> w2 (128,128); cols 64: zero
_W3_ROW = 144      # rows 144:272  -> w3 (128,128); rows 64: and cols C: zero
_BN_ROW = 272      # rows 272:280  -> [g1, be1, g2, be2, g3, be3], lane-padded
_SLAB_ROWS = 280


def restorer_kernel(x_ref, p_ref, o_ref):
    B = x_ref.shape[0]
    C = x_ref.shape[1]
    inv_b = 1.0 / float(B)

    def bn_lrelu(h, gamma, beta):
        # Training-mode BatchNorm1d, affine folded into per-feature scale/shift,
        # one-pass statistics (E[h^2] - mean^2). Padded lanes have h==0 and
        # gamma==beta==0, so they stay exactly 0.
        mean = jnp.sum(h, axis=0, keepdims=True) * inv_b
        mean_sq = jnp.sum(h * h, axis=0, keepdims=True) * inv_b
        var = jnp.maximum(mean_sq - mean * mean, 0.0)
        scale = gamma * jax.lax.rsqrt(var + EPS)       # (1,128) — cheap
        shift = beta - mean * scale                    # (1,128) — cheap
        hn = h * scale + shift                         # 2 full-width VPU ops
        # LeakyReLU(0.2) as a single max (valid because 0 < slope < 1).
        return jnp.maximum(hn, NEG_SLOPE * hn)

    x = x_ref[...]                                     # (B, C)

    w1 = p_ref[_W1_ROW:_W1_ROW + C, :]                 # (C, 128)
    w2 = p_ref[_W2_ROW:_W2_ROW + LANES, :]             # (128, 128)
    w3 = p_ref[_W3_ROW:_W3_ROW + LANES, :]             # (128, 128)
    bn = p_ref[_BN_ROW:_BN_ROW + 8, :]                 # (8, 128), rows 0..5 used

    # Linear biases omitted on purpose: they cancel in the following
    # training-mode BatchNorm, so the result is mathematically identical.
    h = jnp.dot(x, w1, preferred_element_type=jnp.float32)
    h = bn_lrelu(h, bn[0:1, :], bn[1:2, :])

    h = jnp.dot(h, w2, preferred_element_type=jnp.float32)
    h = bn_lrelu(h, bn[2:3, :], bn[3:4, :])

    h = jnp.dot(h, w3, preferred_element_type=jnp.float32)
    h = bn_lrelu(h, bn[4:5, :], bn[5:6, :])

    h = jnp.tanh(h)

    # Softmax over dim=1. tanh output is in [-1,1] so exp is bounded in
    # [e^-1, e]; no max-subtraction needed. Padded lanes (tanh(0)=0 -> exp=1)
    # are masked to 0 before the row sum; the full lane-dense (B,128) block is
    # written and the wrapper slices [:, :C].
    e = jnp.exp(h)
    lane_mask = jax.lax.broadcasted_iota(jnp.int32, (B, LANES), 1) < C
    e = jnp.where(lane_mask, e, 0.0)
    denom = jnp.sum(e, axis=1, keepdims=True)
    o_ref[...] = e * pl.reciprocal(denom, approx=True)


def _pack_params(params, num_classes):
    """Pack all weights + BN affine params into one (280,128) f32 slab with
    8-aligned row offsets and zero padding (so they travel as a single DMA)."""
    (w1, _b1, g1, be1, w2, _b2, g2, be2, w3, _b3, g3, be3) = params
    C = num_classes
    slab = jnp.zeros((_SLAB_ROWS, LANES), jnp.float32)
    slab = slab.at[_W1_ROW:_W1_ROW + C, :].set(w1)                 # (C,128)
    slab = slab.at[_W2_ROW:_W2_ROW + 128, :64].set(w2)             # (128,64)
    slab = slab.at[_W3_ROW:_W3_ROW + 64, :C].set(w3)               # (64,C)
    for i, v in enumerate((g1, be1, g2, be2, g3, be3)):
        v = v.reshape(-1)
        slab = slab.at[_BN_ROW + i, : v.shape[0]].set(v)
    return slab


def restorer_forward(x, params):
    B, C = x.shape
    slab = _pack_params(params, C)

    # VMEM estimate: double-buffered x + output + param slab + live f32
    # intermediates (~6 x (B,128)). Cap below v7x's 64 MiB physical VMEM and
    # above v5e's 16 MiB scoped default.
    est_bytes = 4 * (2 * B * (C + LANES) + _SLAB_ROWS * LANES + 6 * B * LANES)
    vmem_limit = int(min(max(2 * est_bytes, 4 << 20), 48 << 20))

    vmem = pl.BlockSpec(memory_space=pltpu.MemorySpace.VMEM)
    out_pad = pl.pallas_call(
        restorer_kernel,
        out_shape=jax.ShapeDtypeStruct((B, LANES), jnp.float32),
        in_specs=[vmem, vmem],
        out_specs=vmem,
        compiler_params=pltpu.CompilerParams(vmem_limit_bytes=vmem_limit),
        cost_estimate=pl.CostEstimate(
            flops=2 * B * (C * LANES + LANES * LANES + LANES * LANES),
            transcendentals=2 * B * LANES + 3 * LANES,
            bytes_accessed=4 * (B * C + _SLAB_ROWS * LANES + B * LANES),
        ),
    )(x, slab)
    return out_pad[:, :C]


def init_params(key, num_classes=10):
    """Deterministic init mimicking nn.Linear defaults (uniform +-1/sqrt(fan_in)),
    BatchNorm gamma=1, beta=0. Weights stored as (in, out)."""
    dims = [(num_classes, 128), (128, 64), (64, num_classes)]
    params = []
    keys = jax.random.split(key, 6)
    for i, (fin, fout) in enumerate(dims):
        bound = 1.0 / jnp.sqrt(float(fin))
        w = jax.random.uniform(keys[2 * i], (fin, fout), jnp.float32, -bound, bound)
        b = jax.random.uniform(keys[2 * i + 1], (1, fout), jnp.float32, -bound, bound)
        gamma = jnp.ones((1, fout), jnp.float32)
        beta = jnp.zeros((1, fout), jnp.float32)
        params.extend([w, b, gamma, beta])
    return tuple(params)


def restorer_reference(x, params):
    """Pure-JAX reference, faithful to the PyTorch module (biases included)."""
    (w1, b1, g1, be1, w2, b2, g2, be2, w3, b3, g3, be3) = params

    def bn_lrelu(h, g, b):
        mean = jnp.mean(h, axis=0, keepdims=True)
        var = jnp.mean((h - mean) ** 2, axis=0, keepdims=True)
        hn = (h - mean) / jnp.sqrt(var + EPS) * g + b
        return jnp.where(hn >= 0.0, hn, NEG_SLOPE * hn)

    hp = jax.lax.Precision.HIGHEST
    h = jnp.dot(x, w1, precision=hp) + b1
    h = bn_lrelu(h, g1, be1)
    h = jnp.dot(h, w2, precision=hp) + b2
    h = bn_lrelu(h, g2, be2)
    h = jnp.dot(h, w3, precision=hp) + b3
    h = bn_lrelu(h, g3, be3)
    h = jnp.tanh(h)
    return jax.nn.softmax(h, axis=1)


if __name__ == "__main__":
    num_classes = 10
    batch = 8

    key = jax.random.PRNGKey(0)
    k_x, k_p = jax.random.split(key)
    x = jax.random.normal(k_x, (batch, num_classes), dtype=jnp.float32)
    params = init_params(k_p, num_classes)

    out = restorer_forward(x, params)
    out = jax.block_until_ready(out)

    ref = restorer_reference(x, params)
    assert out.shape == (batch, num_classes)
    assert bool(jnp.all(jnp.isfinite(out)))
    assert bool(jnp.allclose(out, ref, rtol=1e-3, atol=2e-3)), "mismatch vs reference"

    print("KERNEL_OK")
</pallas_src>

<mosaic_0001>
module attributes {stable_mosaic.version = 11 : i64} {
  func.func @restorer_kernel(%arg0: memref<8x10xf32, #tpu.memory_space<vmem>>, %arg1: memref<280x128xf32, #tpu.memory_space<vmem>>, %arg2: memref<8x128xf32, #tpu.memory_space<vmem>>) attributes {dimension_semantics = [], scalar_prefetch = 0 : i64, scratch_operands = 0 : i64, tpu.core_type = #tpu.core_type<tc>} {
    %c0 = arith.constant 0 : index
    %c0_0 = arith.constant 0 : index
    %0 = vector.load %arg0[%c0, %c0_0] : memref<8x10xf32, #tpu.memory_space<vmem>>, vector<8x10xf32>
    %c0_1 = arith.constant 0 : index
    %c0_2 = arith.constant 0 : index
    %1 = vector.load %arg1[%c0_1, %c0_2] : memref<280x128xf32, #tpu.memory_space<vmem>>, vector<10x128xf32>
    %c16 = arith.constant 16 : index
    %c0_3 = arith.constant 0 : index
    %2 = vector.load %arg1[%c16, %c0_3] : memref<280x128xf32, #tpu.memory_space<vmem>>, vector<128x128xf32>
    %c144 = arith.constant 144 : index
    %c0_4 = arith.constant 0 : index
    %3 = vector.load %arg1[%c144, %c0_4] : memref<280x128xf32, #tpu.memory_space<vmem>>, vector<128x128xf32>
    %c272 = arith.constant 272 : index
    %c0_5 = arith.constant 0 : index
    %4 = vector.load %arg1[%c272, %c0_5] : memref<280x128xf32, #tpu.memory_space<vmem>>, vector<8x128xf32>
    %cst = arith.constant dense<0.000000e+00> : vector<8x128xf32>
    %5 = tpu.matmul %0, %1, %cst {dimension_numbers = #tpu.dot_dimension_numbers<[1], [0], [0], [1], [0, 0, 1, 1], [], []>} : vector<8x10xf32>, vector<10x128xf32>, vector<8x128xf32> -> vector<8x128xf32>
    %6 = vector.extract_strided_slice %4 {offsets = [0, 0], sizes = [1, 128], strides = [1, 1]} : vector<8x128xf32> to vector<1x128xf32>
    %7 = vector.extract_strided_slice %4 {offsets = [1, 0], sizes = [1, 128], strides = [1, 1]} : vector<8x128xf32> to vector<1x128xf32>
    %cst_6 = arith.constant dense<0.000000e+00> : vector<128xf32>
    %8 = vector.multi_reduction <add>, %5, %cst_6 [0] : vector<8x128xf32> to vector<128xf32>
    %9 = vector.shape_cast %8 : vector<128xf32> to vector<1x128xf32>
    %cst_7 = arith.constant 1.250000e-01 : f32
    %10 = vector.broadcast %cst_7 : f32 to vector<1x128xf32>
    %11 = arith.mulf %9, %10 : vector<1x128xf32>
    %12 = arith.mulf %5, %5 : vector<8x128xf32>
    %cst_8 = arith.constant dense<0.000000e+00> : vector<128xf32>
    %13 = vector.multi_reduction <add>, %12, %cst_8 [0] : vector<8x128xf32> to vector<128xf32>
    %14 = vector.shape_cast %13 : vector<128xf32> to vector<1x128xf32>
    %cst_9 = arith.constant 1.250000e-01 : f32
    %15 = vector.broadcast %cst_9 : f32 to vector<1x128xf32>
    %16 = arith.mulf %14, %15 : vector<1x128xf32>
    %17 = arith.mulf %11, %11 : vector<1x128xf32>
    %18 = arith.subf %16, %17 : vector<1x128xf32>
    %cst_10 = arith.constant 0.000000e+00 : f32
    %19 = vector.broadcast %cst_10 : f32 to vector<1x128xf32>
    %20 = arith.maximumf %18, %19 : vector<1x128xf32>
    %cst_11 = arith.constant 9.99999974E-6 : f32
    %21 = vector.broadcast %cst_11 : f32 to vector<1x128xf32>
    %22 = arith.addf %20, %21 : vector<1x128xf32>
    %23 = math.rsqrt %22 : vector<1x128xf32>
    %24 = arith.mulf %6, %23 : vector<1x128xf32>
    %25 = arith.mulf %11, %24 : vector<1x128xf32>
    %26 = arith.subf %7, %25 : vector<1x128xf32>
    %27 = vector.broadcast %24 : vector<1x128xf32> to vector<8x128xf32>
    %28 = arith.mulf %5, %27 : vector<8x128xf32>
    %29 = vector.broadcast %26 : vector<1x128xf32> to vector<8x128xf32>
    %30 = arith.addf %28, %29 : vector<8x128xf32>
    %cst_12 = arith.constant 2.000000e-01 : f32
    %31 = vector.broadcast %cst_12 : f32 to vector<8x128xf32>
    %32 = arith.mulf %31, %30 : vector<8x128xf32>
    %33 = arith.maximumf %30, %32 : vector<8x128xf32>
    %cst_13 = arith.constant dense<0.000000e+00> : vector<8x128xf32>
    %34 = tpu.matmul %33, %2, %cst_13 {dimension_numbers = #tpu.dot_dimension_numbers<[1], [0], [0], [1], [0, 0, 1, 1], [], []>} : vector<8x128xf32>, vector<128x128xf32>, vector<8x128xf32> -> vector<8x128xf32>
    %35 = vector.extract_strided_slice %4 {offsets = [2, 0], sizes = [1, 128], strides = [1, 1]} : vector<8x128xf32> to vector<1x128xf32>
    %36 = vector.extract_strided_slice %4 {offsets = [3, 0], sizes = [1, 128], strides = [1, 1]} : vector<8x128xf32> to vector<1x128xf32>
    %cst_14 = arith.constant dense<0.000000e+00> : vector<128xf32>
    %37 = vector.multi_reduction <add>, %34, %cst_14 [0] : vector<8x128xf32> to vector<128xf32>
    %38 = vector.shape_cast %37 : vector<128xf32> to vector<1x128xf32>
    %cst_15 = arith.constant 1.250000e-01 : f32
    %39 = vector.broadcast %cst_15 : f32 to vector<1x128xf32>
    %40 = arith.mulf %38, %39 : vector<1x128xf32>
    %41 = arith.mulf %34, %34 : vector<8x128xf32>
    %cst_16 = arith.constant dense<0.000000e+00> : vector<128xf32>
    %42 = vector.multi_reduction <add>, %41, %cst_16 [0] : vector<8x128xf32> to vector<128xf32>
    %43 = vector.shape_cast %42 : vector<128xf32> to vector<1x128xf32>
    %cst_17 = arith.constant 1.250000e-01 : f32
    %44 = vector.broadcast %cst_17 : f32 to vector<1x128xf32>
    %45 = arith.mulf %43, %44 : vector<1x128xf32>
    %46 = arith.mulf %40, %40 : vector<1x128xf32>
    %47 = arith.subf %45, %46 : vector<1x128xf32>
    %cst_18 = arith.constant 0.000000e+00 : f32
    %48 = vector.broadcast %cst_18 : f32 to vector<1x128xf32>
    %49 = arith.maximumf %47, %48 : vector<1x128xf32>
    %cst_19 = arith.constant 9.99999974E-6 : f32
    %50 = vector.broadcast %cst_19 : f32 to vector<1x128xf32>
    %51 = arith.addf %49, %50 : vector<1x128xf32>
    %52 = math.rsqrt %51 : vector<1x128xf32>
    %53 = arith.mulf %35, %52 : vector<1x128xf32>
    %54 = arith.mulf %40, %53 : vector<1x128xf32>
    %55 = arith.subf %36, %54 : vector<1x128xf32>
    %56 = vector.broadcast %53 : vector<1x128xf32> to vector<8x128xf32>
    %57 = arith.mulf %34, %56 : vector<8x128xf32>
    %58 = vector.broadcast %55 : vector<1x128xf32> to vector<8x128xf32>
    %59 = arith.addf %57, %58 : vector<8x128xf32>
    %cst_20 = arith.constant 2.000000e-01 : f32
    %60 = vector.broadcast %cst_20 : f32 to vector<8x128xf32>
    %61 = arith.mulf %60, %59 : vector<8x128xf32>
    %62 = arith.maximumf %59, %61 : vector<8x128xf32>
    %cst_21 = arith.constant dense<0.000000e+00> : vector<8x128xf32>
    %63 = tpu.matmul %62, %3, %cst_21 {dimension_numbers = #tpu.dot_dimension_numbers<[1], [0], [0], [1], [0, 0, 1, 1], [], []>} : vector<8x128xf32>, vector<128x128xf32>, vector<8x128xf32> -> vector<8x128xf32>
    %64 = vector.extract_strided_slice %4 {offsets = [4, 0], sizes = [1, 128], strides = [1, 1]} : vector<8x128xf32> to vector<1x128xf32>
    %65 = vector.extract_strided_slice %4 {offsets = [5, 0], sizes = [1, 128], strides = [1, 1]} : vector<8x128xf32> to vector<1x128xf32>
    %cst_22 = arith.constant dense<0.000000e+00> : vector<128xf32>
    %66 = vector.multi_reduction <add>, %63, %cst_22 [0] : vector<8x128xf32> to vector<128xf32>
    %67 = vector.shape_cast %66 : vector<128xf32> to vector<1x128xf32>
    %cst_23 = arith.constant 1.250000e-01 : f32
    %68 = vector.broadcast %cst_23 : f32 to vector<1x128xf32>
    %69 = arith.mulf %67, %68 : vector<1x128xf32>
    %70 = arith.mulf %63, %63 : vector<8x128xf32>
    %cst_24 = arith.constant dense<0.000000e+00> : vector<128xf32>
    %71 = vector.multi_reduction <add>, %70, %cst_24 [0] : vector<8x128xf32> to vector<128xf32>
    %72 = vector.shape_cast %71 : vector<128xf32> to vector<1x128xf32>
    %cst_25 = arith.constant 1.250000e-01 : f32
    %73 = vector.broadcast %cst_25 : f32 to vector<1x128xf32>
    %74 = arith.mulf %72, %73 : vector<1x128xf32>
    %75 = arith.mulf %69, %69 : vector<1x128xf32>
    %76 = arith.subf %74, %75 : vector<1x128xf32>
    %cst_26 = arith.constant 0.000000e+00 : f32
    %77 = vector.broadcast %cst_26 : f32 to vector<1x128xf32>
    %78 = arith.maximumf %76, %77 : vector<1x128xf32>
    %cst_27 = arith.constant 9.99999974E-6 : f32
    %79 = vector.broadcast %cst_27 : f32 to vector<1x128xf32>
    %80 = arith.addf %78, %79 : vector<1x128xf32>
    %81 = math.rsqrt %80 : vector<1x128xf32>
    %82 = arith.mulf %64, %81 : vector<1x128xf32>
    %83 = arith.mulf %69, %82 : vector<1x128xf32>
    %84 = arith.subf %65, %83 : vector<1x128xf32>
    %85 = vector.broadcast %82 : vector<1x128xf32> to vector<8x128xf32>
    %86 = arith.mulf %63, %85 : vector<8x128xf32>
    %87 = vector.broadcast %84 : vector<1x128xf32> to vector<8x128xf32>
    %88 = arith.addf %86, %87 : vector<8x128xf32>
    %cst_28 = arith.constant 2.000000e-01 : f32
    %89 = vector.broadcast %cst_28 : f32 to vector<8x128xf32>
    %90 = arith.mulf %89, %88 : vector<8x128xf32>
    %91 = arith.maximumf %88, %90 : vector<8x128xf32>
    %92 = math.tanh %91 : vector<8x128xf32>
    %93 = math.exp %92 : vector<8x128xf32>
    %94 = tpu.iota {dimensions = array<i32: 1>} : vector<8x128xi32>
    %c10_i32 = arith.constant 10 : i32
    %95 = vector.broadcast %c10_i32 : i32 to vector<8x128xi32>
    %96 = arith.cmpi slt, %94, %95 : vector<8x128xi32>
    %cst_29 = arith.constant 0.000000e+00 : f32
    %97 = vector.broadcast %cst_29 : f32 to vector<8x128xf32>
    %98 = arith.select %96, %93, %97 : vector<8x128xi1>, vector<8x128xf32>
    %cst_30 = arith.constant dense<0.000000e+00> : vector<8xf32>
    %99 = vector.multi_reduction <add>, %98, %cst_30 [1] : vector<8x128xf32> to vector<8xf32>
    %100 = vector.shape_cast %99 : vector<8xf32> to vector<8x1xf32>
    %101 = tpu.reciprocal %100 {approx = true} : vector<8x1xf32> -> vector<8x1xf32>
    %102 = vector.broadcast %101 : vector<8x1xf32> to vector<8x128xf32>
    %103 = arith.mulf %98, %102 : vector<8x128xf32>
    %c0_31 = arith.constant 0 : index
    %c0_32 = arith.constant 0 : index
    %104 = vector.load %arg2[%c0_31, %c0_32] : memref<8x128xf32, #tpu.memory_space<vmem>>, vector<8x128xf32>
    tpu.vector_store %arg2[%c0_31, %c0_32], %103 {strides = array<i32>} : memref<8x128xf32, #tpu.memory_space<vmem>>, vector<8x128xf32>,
    return
  }
}

</mosaic_0001>

<llo_original>
// kernel: tpu_custom_call.1
$region0: #{tpu_custom_call.1}
  #allocation0 [shape = 'u32[]', space=smem, size = 0x4, offset = 0x4, fixed_abs, tag = 'smem constant byte address 0x4 - core index']
  #allocation1 [shape = 'u32[72,128]{1,0:T(1,128)}', space=vmem, size = 0x9000, scoped, tag = 'internal scratch']
  %s0 = inlined_call_operand.hbm [shape: f32[8,10], index: 0, kind: input, shape index: {}]
  %s1 = inlined_call_operand.hbm [shape: f32[280,128], index: 1, kind: input, shape index: {}]
  %s2 = inlined_call_operand.hbm [shape: f32[8,128], index: 2, kind: output, shape index: {}]
  %s3 = sld [smem:[#allocation0]]
  $region26: #{tpu_custom_call.1} parent=0
    _
  %s5 = ssub.s32 1, %s3
  %s6 = scalar_select 0, %s5, %s3
  $region1: #{tpu_custom_call.1} parent=0
    #allocation2 [shape = 'u8[4096]{0}', space=vmem, size = 0x1000, scoped, tag = 'input window, operand 0, single buffered']
    #allocation3 [shape = 's32[1]{0}', space=sflag, size = 0x4, scoped, tag = 'scoped memory for tpu_custom_call.1']
    #allocation4 [shape = 's32[1]{0}', space=sflag, size = 0x4, scoped, tag = 'scoped memory for tpu_custom_call.1']
    #allocation5 [shape = 'u8[143360]{0}', space=vmem, size = 0x23000, scoped, tag = 'input window, operand 1, single buffered']
    #allocation6 [shape = 's32[1]{0}', space=sflag, size = 0x4, scoped, tag = 'scoped memory for tpu_custom_call.1']
    #allocation7 [shape = 'u8[4096]{0}', space=vmem, size = 0x1000, scoped, tag = 'output window, operand 0, single buffered']
    %7 = vsyncpa [#allocation3], 0
    %8 = vsyncpa [#allocation6], 0
    %9 = vsyncpa [#allocation4], 0
    // Predicated region
    $region2: #{tpu_custom_call.1} parent=1 // pred_check
      _
    $region3: #{tpu_custom_call.1} parent=1 // pred_check_branch
      %11 = sbr.rel (0) target = $region5
    $region4: #{tpu_custom_call.1} parent=1 // pred_region
      %13 = vsyncadd [#allocation3], 0
      %s15 = sshll.u32 %s0, 4
      %s16 = int_to_ptr.hbm [resolvable:$true] %s15
      %s17 = sshll.u32 [#allocation2], 4
      %s18 = int_to_ptr.vmem [resolvable:$true] %s17
      %20 = dma.hbm_to_vmem [thread:$0]  %s16, 128, %s18, [#allocation3]
    $region5: #{tpu_custom_call.1} parent=1 // pred_fallthru
      _
    // Predicated region
    $region6: #{tpu_custom_call.1} parent=1 // pred_check
      _
    $region7: #{tpu_custom_call.1} parent=1 // pred_check_branch
      %22 = sbr.rel (0) target = $region9
    $region8: #{tpu_custom_call.1} parent=1 // pred_region
      %24 = vsyncadd [#allocation6], 0
      %s25 = sshll.u32 %s1, 4
      %s26 = int_to_ptr.hbm [resolvable:$true] %s25
      %s27 = sshll.u32 [#allocation5], 4
      %s28 = int_to_ptr.vmem [resolvable:$true] %s27
      %33 = dma.hbm_to_vmem [thread:$0]  %s26, 4480, %s28, [#allocation6], 128, 128, 8
    $region9: #{tpu_custom_call.1} parent=1 // pred_fallthru
      _
    // Predicated region
    $region10: #{tpu_custom_call.1} parent=1 // pred_check
      _
    $region11: #{tpu_custom_call.1} parent=1 // pred_check_branch
      %35 = sbr.rel (0) target = $region13
    $region12: #{tpu_custom_call.1} parent=1 // pred_region
      %37 = dma.done [#allocation3], 128
    $region13: #{tpu_custom_call.1} parent=1 // pred_fallthru
      _
    // Predicated region
    $region14: #{tpu_custom_call.1} parent=1 // pred_check
      _
    $region15: #{tpu_custom_call.1} parent=1 // pred_check_branch
      %39 = sbr.rel (0) target = $region17
    $region16: #{tpu_custom_call.1} parent=1 // pred_region
      %41 = dma.done [#allocation6], 4480
    $region17: #{tpu_custom_call.1} parent=1 // pred_fallthru
      _
    %v42 = vld [vmem:[#allocation2] sm:$0xff]
    %v43 = vld [vmem:[#allocation5] sm:$0xff]
    %v44 = vld [vmem:[#allocation5 + $0x8] sm:$0x3]
    %v45 = vld [vmem:[#allocation5 + $0x10] sm:$0xff]
    %v46 = vld [vmem:[#allocation5 + $0x18] sm:$0xff]
    %v47 = vld [vmem:[#allocation5 + $0x20] sm:$0xff]
    %v48 = vld [vmem:[#allocation5 + $0x28] sm:$0xff]
    %v49 = vld [vmem:[#allocation5 + $0x30] sm:$0xff]
    %v50 = vld [vmem:[#allocation5 + $0x38] sm:$0xff]
    %v51 = vld [vmem:[#allocation5 + $0x40] sm:$0xff]
    %v52 = vld [vmem:[#allocation5 + $0x48] sm:$0xff]
    %v53 = vld [vmem:[#allocation5 + $0x50] sm:$0xff]
    %v54 = vld [vmem:[#allocation5 + $0x58] sm:$0xff]
    %v55 = vld [vmem:[#allocation5 + $0x60] sm:$0xff]
    %v56 = vld [vmem:[#allocation5 + $0x68] sm:$0xff]
    %v57 = vld [vmem:[#allocation5 + $0x70] sm:$0xff]
    %v58 = vld [vmem:[#allocation5 + $0x78] sm:$0xff]
    %v59 = vld [vmem:[#allocation5 + $0x80] sm:$0xff]
    %v60 = vld [vmem:[#allocation5 + $0x88] sm:$0xff]
    %v61 = vld [vmem:[#allocation5 + $0x90] sm:$0xff]
    %v62 = vld [vmem:[#allocation5 + $0x98] sm:$0xff]
    %v63 = vld [vmem:[#allocation5 + $0xa0] sm:$0xff]
    %v64 = vld [vmem:[#allocation5 + $0xa8] sm:$0xff]
    %v65 = vld [vmem:[#allocation5 + $0xb0] sm:$0xff]
    %v66 = vld [vmem:[#allocation5 + $0xb8] sm:$0xff]
    %v67 = vld [vmem:[#allocation5 + $0xc0] sm:$0xff]
    %v68 = vld [vmem:[#allocation5 + $0xc8] sm:$0xff]
    %v69 = vld [vmem:[#allocation5 + $0xd0] sm:$0xff]
    %v70 = vld [vmem:[#allocation5 + $0xd8] sm:$0xff]
    %v71 = vld [vmem:[#allocation5 + $0xe0] sm:$0xff]
    %v72 = vld [vmem:[#allocation5 + $0xe8] sm:$0xff]
    %v73 = vld [vmem:[#allocation5 + $0xf0] sm:$0xff]
    %v74 = vld [vmem:[#allocation5 + $0xf8] sm:$0xff]
    %v75 = vld [vmem:[#allocation5 + $0x100] sm:$0xff]
    %v76 = vld [vmem:[#allocation5 + $0x108] sm:$0xff]
    %v77 = vld [vmem:[#allocation5 + $0x110] sm:$0xff]
    %vm78 = vcmask 80896
    %v80 = vsel %vm78, %v42, 0
    %vm82 = vcmask 1041408
    %v84 = vsel %vm82, %v44, 0
    %86 = vmatpush.msra.mxu0 0.0
    %87 = vmatpush.msra.mxu0 0.0
    %88 = vmatpush.msra.mxu0 0.0
    %89 = vmatpush.msra.mxu0 0.0
    %90 = vmatpush.msra.mxu0 0.0
    %91 = vmatpush.msra.mxu0 0.0
    %92 = vmatpush.msra.mxu0 0.0
    %93 = vmatpush.msra.mxu0 0.0
    %94 = vmatpush.msra.mxu0 0.0
    %95 = vmatpush.msra.mxu0 0.0
    %96 = vmatpush.msra.mxu0 0.0
    %97 = vmatpush.msra.mxu0 0.0
    %98 = vmatpush.msra.mxu0 0.0
    %99 = vmatpush.msra.mxu0 0.0
    %100 = vmatpush.msra.mxu0 %v84
    %101 = vmatpush.msra.mxu0 %v43
    %102 = vmatmul.f32.gmra.mxu0 %v80
    %v103 = vpop.f32.mrf.mxu0
    %v104 = vadd.f32 0.0, %v103
    %105 = vdwg.mxu0
    %v106 = vrot.slane %v104, 4
    %v107 = vadd.f32 %v104, %v106
    %v108 = vrot.slane %v107, 2
    %v109 = vadd.f32 %v107, %v108
    %v110 = vrot.slane %v109, 1
    %v111 = vadd.f32 %v109, %v110
    %v112 = vmul.f32 %v111, 0.125
    %v113 = vmul.f32 %v104, %v104
    %v114 = vrot.slane %v113, 4
    %v115 = vadd.f32 %v113, %v114
    %v116 = vrot.slane %v115, 2
    %v117 = vadd.f32 %v115, %v116
    %v118 = vrot.slane %v117, 1
    %v119 = vadd.f32 %v117, %v118
    %v120 = vmul.f32 %v119, 0.125
    %v121 = vmul.f32 %v112, %v112
    %v122 = vsub.f32 %v120, %v121
    %v123 = vmax.f32 %v122, 0.0
    %v124 = vadd.f32 %v123, 1e-05
    %v125 = vrsqrt.pop %v124
    %v126 = vmul.f32 %v125, %v124
    %v127 = vmul.f32 %v126, %v125
    %v128 = vmul.f32 0.5, %v127
    %v129 = vsub.f32 1.5, %v128
    %v130 = vmul.f32 %v125, %v129
    %vm131 = vweird.f32 %v124
    %vm132 = vweird.f32 %v125
    %vm133 = vmor %vm131, %vm132
    %v134 = vsel %vm133, %v125, %v130
    %v135 = vmul.f32 %v77, %v134
    %v136 = vmul.f32 %v112, %v135
    %v138 = vrot.slane %v136, 7
    %v140 = vsub.f32 %v77, %v138
    %v141 = vperm.slane %v135, 0
    %v142 = vmul.f32 %v104, %v141
    %v143 = vperm.slane %v140, 1
    %v144 = vadd.f32 %v142, %v143
    %v145 = vmul.f32 %v144, 0.2
    %v146 = vmax.f32 %v144, %v145
    %147 = vmatpush.msra.mxu0 %v60
    %148 = vmatpush.msra.mxu0 %v59
    %149 = vmatpush.msra.mxu0 %v58
    %150 = vmatpush.msra.mxu0 %v57
    %151 = vmatpush.msra.mxu0 %v56
    %152 = vmatpush.msra.mxu0 %v55
    %153 = vmatpush.msra.mxu0 %v54
    %154 = vmatpush.msra.mxu0 %v53
    %155 = vmatpush.msra.mxu0 %v52
    %156 = vmatpush.msra.mxu0 %v51
    %157 = vmatpush.msra.mxu0 %v50
    %158 = vmatpush.msra.mxu0 %v49
    %159 = vmatpush.msra.mxu0 %v48
    %160 = vmatpush.msra.mxu0 %v47
    %161 = vmatpush.msra.mxu0 %v46
    %162 = vmatpush.msra.mxu0 %v45
    %163 = vmatmul.f32.gmra.mxu0 %v146
    %v164 = vpop.f32.mrf.mxu0
    %v165 = vadd.f32 0.0, %v164
    %166 = vdwg.mxu0
    %v167 = vrot.slane %v165, 4
    %v168 = vadd.f32 %v165, %v167
    %v169 = vrot.slane %v168, 2
    %v170 = vadd.f32 %v168, %v169
    %v171 = vrot.slane %v170, 1
    %v172 = vadd.f32 %v170, %v171
    %v173 = vmul.f32 %v172, 0.125
    %v174 = vmul.f32 %v165, %v165
    %v175 = vrot.slane %v174, 4
    %v176 = vadd.f32 %v174, %v175
    %v177 = vrot.slane %v176, 2
    %v178 = vadd.f32 %v176, %v177
    %v179 = vrot.slane %v178, 1
    %v180 = vadd.f32 %v178, %v179
    %v181 = vmul.f32 %v180, 0.125
    %v182 = vmul.f32 %v173, %v173
    %v183 = vsub.f32 %v181, %v182
    %v184 = vmax.f32 %v183, 0.0
    %v185 = vadd.f32 %v184, 1e-05
    %v186 = vrsqrt.pop %v185
    %v187 = vmul.f32 %v186, %v185
    %v188 = vmul.f32 %v187, %v186
    %v189 = vmul.f32 0.5, %v188
    %v190 = vsub.f32 1.5, %v189
    %v191 = vmul.f32 %v186, %v190
    %vm192 = vweird.f32 %v185
    %vm193 = vweird.f32 %v186
    %vm194 = vmor %vm192, %vm193
    %v195 = vsel %vm194, %v186, %v191
    %v196 = vmul.f32 %v77, %v195
    %v197 = vmul.f32 %v173, %v196
    %v199 = vrot.slane %v197, 7
    %v201 = vsub.f32 %v77, %v199
    %v202 = vperm.slane %v196, 2
    %v203 = vmul.f32 %v165, %v202
    %v204 = vperm.slane %v201, 3
    %v205 = vadd.f32 %v203, %v204
    %v206 = vmul.f32 %v205, 0.2
    %v207 = vmax.f32 %v205, %v206
    %208 = vmatpush.msra.mxu0 %v76
    %209 = vmatpush.msra.mxu0 %v75
    %210 = vmatpush.msra.mxu0 %v74
    %211 = vmatpush.msra.mxu0 %v73
    %212 = vmatpush.msra.mxu0 %v72
    %213 = vmatpush.msra.mxu0 %v71
    %214 = vmatpush.msra.mxu0 %v70
    %215 = vmatpush.msra.mxu0 %v69
    %216 = vmatpush.msra.mxu0 %v68
    %217 = vmatpush.msra.mxu0 %v67
    %218 = vmatpush.msra.mxu0 %v66
    %219 = vmatpush.msra.mxu0 %v65
    %220 = vmatpush.msra.mxu0 %v64
    %221 = vmatpush.msra.mxu0 %v63
    %222 = vmatpush.msra.mxu0 %v62
    %223 = vmatpush.msra.mxu0 %v61
    %224 = vmatmul.f32.gmra.mxu0 %v207
    %v225 = vpop.f32.mrf.mxu0
    %v226 = vadd.f32 0.0, %v225
    %227 = vdwg.mxu0
    %v228 = vrot.slane %v226, 4
    %v229 = vadd.f32 %v226, %v228
    %v230 = vrot.slane %v229, 2
    %v231 = vadd.f32 %v229, %v230
    %v232 = vrot.slane %v231, 1
    %v233 = vadd.f32 %v231, %v232
    %v234 = vmul.f32 %v233, 0.125
    %v235 = vmul.f32 %v226, %v226
    %v236 = vrot.slane %v235, 4
    %v237 = vadd.f32 %v235, %v236
    %v238 = vrot.slane %v237, 2
    %v239 = vadd.f32 %v237, %v238
    %v240 = vrot.slane %v239, 1
    %v241 = vadd.f32 %v239, %v240
    %v242 = vmul.f32 %v241, 0.125
    %v243 = vmul.f32 %v234, %v234
    %v244 = vsub.f32 %v242, %v243
    %v245 = vmax.f32 %v244, 0.0
    %v246 = vadd.f32 %v245, 1e-05
    %v247 = vrsqrt.pop %v246
    %v248 = vmul.f32 %v247, %v246
    %v249 = vmul.f32 %v248, %v247
    %v250 = vmul.f32 0.5, %v249
    %v251 = vsub.f32 1.5, %v250
    %v252 = vmul.f32 %v247, %v251
    %vm253 = vweird.f32 %v246
    %vm254 = vweird.f32 %v247
    %vm255 = vmor %vm253, %vm254
    %v256 = vsel %vm255, %v247, %v252
    %v257 = vmul.f32 %v77, %v256
    %v258 = vmul.f32 %v234, %v257
    %v260 = vrot.slane %v258, 7
    %v262 = vsub.f32 %v77, %v260
    %v263 = vperm.slane %v257, 4
    %v264 = vmul.f32 %v226, %v263
    %v265 = vperm.slane %v262, 5
    %v266 = vadd.f32 %v264, %v265
    %v267 = vmul.f32 %v266, 0.2
    %v268 = vmax.f32 %v266, %v267
    %v269 = vtanh.pop %v268
    %v270 = vmul.f32 %v269, 1.442695
    %v271 = vpow.pop %v270
    %v272 = vlaneseq
    %v273 = vand.u32 %v272, 127
    %vm274 = vcmp.lt.s32.totalorder %v273, 10
    %v275 = vsel %vm274, %v271, 0.0
    %276 = vadd.xlane.f32.xlu0 %v275
    %v277 = vpop.xlane.xlu0 %276
    %v278 = vrcp.pop %v277
    %v279 = vmul.f32 %v275, %v278
    %280 = vst [vmem:[#allocation7] sm:$0xff] %v279
    // Predicated region
    $region18: #{tpu_custom_call.1} parent=1 // pred_check
      _
    $region19: #{tpu_custom_call.1} parent=1 // pred_check_branch
      %282 = sbr.rel (0) target = $region21
    $region20: #{tpu_custom_call.1} parent=1 // pred_region
      %284 = vsyncadd [#allocation4], 0
      %s286 = sshll.u32 [#allocation7], 4
      %s287 = int_to_ptr.vmem [resolvable:$true] %s286
      %s288 = sshll.u32 %s2, 4
      %s289 = int_to_ptr.hbm [resolvable:$true] %s288
      %291 = dma.vmem_to_hbm [thread:$0]  %s287, 128, %s289, [#allocation4]
    $region21: #{tpu_custom_call.1} parent=1 // pred_fallthru
      _
    // Predicated region
    $region22: #{tpu_custom_call.1} parent=1 // pred_check
      _
    $region23: #{tpu_custom_call.1} parent=1 // pred_check_branch
      %293 = sbr.rel (0) target = $region25
    $region24: #{tpu_custom_call.1} parent=1 // pred_region
      %295 = dma.done [#allocation4], 128
    $region25: #{tpu_custom_call.1} parent=1 // pred_fallthru
      _
    %296 = vsyncpa [#allocation3], 1
    %297 = vsyncpa [#allocation6], 1
    %298 = vsyncpa [#allocation4], 1

</llo_original>
